<compile_context>
chip_gen: v7x
topology: tpu7x:2x2x1
jax: 0.10.0
libtpu: 0.0.40
codegen_flags: <defaults>
</compile_context>

<pallas_src>
import functools

import jax
import jax.numpy as jnp
from jax.experimental import pallas as pl
from jax.experimental.pallas import tpu as pltpu


def _round_up(x, m):
    return ((x + m - 1) // m) * m


# ------------------------------ fused kernel ------------------------------

def _mlp_fused_kernel(*refs, n_layers, n_skip, act_last, compute_dtype):
    """One batch tile of the full MLP forward (all layers fused).

    refs = (x, W_0..W_{L-1}, b_0..b_{L-1}, Ws_0..Ws_{S-1}, bs_0..bs_{S-1}, out)
      x    : [TB, Din0_pad]
      W_l  : [Din_l_pad, Dout_l_pad]   (per-layer padded)
      b_l  : [1, Dout_l_pad]
      Ws_s : [Din_s_pad, Dlast_pad]
      bs_s : [1, Dlast_pad]
      out  : [TB, Dlast_pad]
    """
    x_ref = refs[0]
    w_refs = refs[1:1 + n_layers]
    b_refs = refs[1 + n_layers:1 + 2 * n_layers]
    sw_refs = refs[1 + 2 * n_layers:1 + 2 * n_layers + n_skip]
    sb_refs = refs[1 + 2 * n_layers + n_skip:1 + 2 * n_layers + 2 * n_skip]
    o_ref = refs[-1]

    h = x_ref[...].astype(jnp.float32)
    acc = jnp.zeros(o_ref.shape, jnp.float32) if n_skip > 0 else None

    # Static unroll: n_layers is a small compile-time Python int.
    # TODO(synk): replace with a layer grid axis + VMEM-scratch carry for
    # deep MLPs (bounds vreg pressure, enables weight streaming on v7x).
    for l in range(n_layers):
        if l < n_skip:
            # Skip projection of the *current* layer input; ReLU always
            # applied (matches PyTorch: activation(skip_layer(x))).
            s = jnp.dot(h.astype(compute_dtype),
                        sw_refs[l][...].astype(compute_dtype),
                        preferred_element_type=jnp.float32)
            s = s + sb_refs[l][...]
            acc = acc + jnp.maximum(s, 0.0)

        h = jnp.dot(h.astype(compute_dtype),
                    w_refs[l][...].astype(compute_dtype),
                    preferred_element_type=jnp.float32)
        h = h + b_refs[l][...]
        if (l < n_layers - 1) or act_last:
            h = jnp.maximum(h, 0.0)

    if n_skip > 0:
        h = h + acc
    o_ref[...] = h.astype(o_ref.dtype)


def _vmem_limit_bytes(param_bytes, io_block_bytes):
    """Scoped-VMEM limit sized from the actual resident buffers (+ headroom)."""
    needed = int(1.5 * (param_bytes + 2 * io_block_bytes)) + (8 << 20)
    try:
        cap = int(pltpu.get_tpu_info().vmem_capacity_bytes) * 3 // 4
    except Exception:  # pragma: no cover - conservative fallback off-TPU
        cap = 96 << 20
    return max(32 << 20, min(needed, cap))


def mlp_fused_forward(x_pad, w_main, b_main, w_skip, b_skip, *,
                      n_layers, n_skip, act_last, compute_dtype,
                      batch_tile=256):
    B_pad, Din_pad = x_pad.shape
    Dout_pad = w_main[-1].shape[1]

    tb = B_pad if B_pad <= batch_tile else batch_tile
    assert B_pad % tb == 0
    grid = (B_pad // tb,)

    kernel = functools.partial(_mlp_fused_kernel, n_layers=n_layers,
                               n_skip=n_skip, act_last=act_last,
                               compute_dtype=compute_dtype)

    def const_spec(a):
        zeros = (0,) * a.ndim
        return pl.BlockSpec(a.shape, lambda i, _z=zeros: _z)

    in_specs = [pl.BlockSpec((tb, Din_pad), lambda i: (i, 0))]
    in_specs += [const_spec(w) for w in w_main]
    in_specs += [const_spec(b) for b in b_main]
    in_specs += [const_spec(w) for w in w_skip]
    in_specs += [const_spec(b) for b in b_skip]

    inputs = [x_pad, *w_main, *b_main, *w_skip, *b_skip]

    # Cost estimate from the real per-layer padded dims (not a square slab).
    flops = 2 * B_pad * (sum(w.shape[0] * w.shape[1] for w in w_main)
                         + sum(w.shape[0] * w.shape[1] for w in w_skip))
    param_bytes = sum(int(a.size) * a.dtype.itemsize
                      for a in (*w_main, *b_main, *w_skip, *b_skip))
    io_block_bytes = 4 * tb * (Din_pad + Dout_pad)
    bytes_accessed = param_bytes + 4 * B_pad * (Din_pad + Dout_pad)

    return pl.pallas_call(
        kernel,
        out_shape=jax.ShapeDtypeStruct((B_pad, Dout_pad), x_pad.dtype),
        grid=grid,
        in_specs=in_specs,
        out_specs=pl.BlockSpec((tb, Dout_pad), lambda i: (i, 0)),
        compiler_params=pltpu.CompilerParams(
            dimension_semantics=("parallel",),
            vmem_limit_bytes=_vmem_limit_bytes(param_bytes, io_block_bytes)),
        cost_estimate=pl.CostEstimate(flops=flops, transcendentals=0,
                                      bytes_accessed=bytes_accessed),
    )(*inputs)


def _mlp_forward_impl(x, w_main, b_main, w_skip, b_skip, *,
                      n_layers, n_skip, act_last, out_dim, compute_dtype):
    """Pad -> fused pallas_call -> slice. Intended to run under jax.jit."""
    B, Din = x.shape
    Din_pad = w_main[0].shape[0]
    B_pad = _round_up(max(B, 8), 8)
    if B_pad > 256:                       # keep batch tiles uniform
        B_pad = _round_up(B_pad, 256)
    x_pad = jnp.zeros((B_pad, Din_pad), x.dtype).at[:B, :Din].set(x)
    out_pad = mlp_fused_forward(
        x_pad, w_main, b_main, w_skip, b_skip,
        n_layers=n_layers, n_skip=n_skip, act_last=act_last,
        compute_dtype=compute_dtype)
    return out_pad[:B, :out_dim]


# ------------------------------ MLP wrapper --------------------------------

class MLPPallas:
    """JAX/Pallas port of the PyTorch MLP module (single fused, jitted kernel)."""

    def __init__(self, dims, skip_connection=False,
                 activation_in_last_layer=True, key=None, use_bf16=False):
        if key is None:
            key = jax.random.PRNGKey(0)
        self.dims = list(dims)
        self._activation_in_last_layer = bool(activation_in_last_layer)
        self.out_last = dims[-1][-1]
        param_dtype = jnp.bfloat16 if use_bf16 else jnp.float32
        compute_dtype = jnp.bfloat16 if use_bf16 else jnp.float32

        def init_linear(k, fan_in, fan_out):
            # Match torch.nn.Linear default init: U(-1/sqrt(in), 1/sqrt(in)).
            kw, kb = jax.random.split(k)
            bound = 1.0 / float(fan_in) ** 0.5
            w = jax.random.uniform(kw, (fan_in, fan_out), jnp.float32,
                                   minval=-bound, maxval=bound)
            b = jax.random.uniform(kb, (1, fan_out), jnp.float32,
                                   minval=-bound, maxval=bound)
            return w, b

        # Raw (unpadded) params, kept for the pure-JAX reference.
        self.layers = []
        self.skip_layers = []
        for h, (i, j) in enumerate(dims):
            key, k1 = jax.random.split(key)
            self.layers.append(init_linear(k1, i, j))
            if skip_connection and len(dims) > 1 and (h < len(dims) - 1):
                key, k2 = jax.random.split(key)
                self.skip_layers.append(init_linear(k2, i, self.out_last))
        self._skip_connection = skip_connection and len(self.skip_layers) > 0
        self.n_layers = len(self.layers)
        self.n_skip = len(self.skip_layers) if self._skip_connection else 0

        # Per-layer (8,128)-aligned padding: rows to round_up(Din,128),
        # cols to round_up(Dout,128). Padded lanes stay exactly 0.
        def pad_w(w):
            rp = _round_up(w.shape[0], 128)
            cp = _round_up(w.shape[1], 128)
            out = jnp.zeros((rp, cp), param_dtype)
            return out.at[:w.shape[0], :w.shape[1]].set(w.astype(param_dtype))

        def pad_b(b):
            cp = _round_up(b.shape[1], 128)
            out = jnp.zeros((1, cp), jnp.float32)   # biases stay f32
            return out.at[:, :b.shape[1]].set(b)

        self.w_main = tuple(pad_w(w) for (w, _) in self.layers)
        self.b_main = tuple(pad_b(b) for (_, b) in self.layers)
        if self.n_skip > 0:
            self.w_skip = tuple(pad_w(w) for (w, _) in self.skip_layers)
            self.b_skip = tuple(pad_b(b) for (_, b) in self.skip_layers)
        else:
            self.w_skip = ()
            self.b_skip = ()

        # One jitted executable per instance: pad + pallas_call + slice fused.
        self._forward = jax.jit(functools.partial(
            _mlp_forward_impl,
            n_layers=self.n_layers, n_skip=self.n_skip,
            act_last=self._activation_in_last_layer,
            out_dim=self.out_last, compute_dtype=compute_dtype))

    def __call__(self, x):
        # TODO(synk): callers with many small inputs should stack them into a
        # larger batch before calling (8 rows uses <=6% of the MXU rows).
        return self._forward(x, self.w_main, self.b_main,
                             self.w_skip, self.b_skip)


# --------------------------------- main -------------------------------------

if __name__ == "__main__":
    key = jax.random.PRNGKey(0)
    kx, kp1, kp2 = jax.random.split(key, 3)

    dims = [(16, 32), (32, 32), (32, 8)]
    batch = 4
    x = jax.random.normal(kx, (batch, dims[0][0]), dtype=jnp.float32)

    def ref_forward(mlp, x):
        xs_skip = []
        h = x
        for i, (w, b) in enumerate(mlp.layers):
            if mlp._skip_connection and i < len(mlp.skip_layers):
                sw, sb = mlp.skip_layers[i]
                xs_skip.append(jnp.maximum(h @ sw + sb, 0.0))
            h = h @ w + b
            if i < len(mlp.layers) - 1 or mlp._activation_in_last_layer:
                h = jnp.maximum(h, 0.0)
        if mlp._skip_connection:
            h = sum([h, *xs_skip])
        return h

    # Case 1: skip connections, activation in last layer.
    mlp1 = MLPPallas(dims, skip_connection=True,
                     activation_in_last_layer=True, key=kp1)
    out1 = jax.block_until_ready(mlp1(x))
    assert out1.shape == (batch, dims[-1][-1]), out1.shape
    assert jnp.allclose(out1, ref_forward(mlp1, x), atol=1e-5, rtol=1e-5)

    # Case 2: no skip connections, no activation in last layer.
    mlp2 = MLPPallas(dims, skip_connection=False,
                     activation_in_last_layer=False, key=kp2)
    out2 = jax.block_until_ready(mlp2(x))
    assert out2.shape == (batch, dims[-1][-1]), out2.shape
    assert jnp.allclose(out2, ref_forward(mlp2, x), atol=1e-5, rtol=1e-5)

    print("KERNEL_OK")
</pallas_src>

<mosaic_0001>
module attributes {stable_mosaic.version = 11 : i64} {
  func.func @_mlp_fused_kernel(%arg0: i32, %arg1: memref<8x128xf32, #tpu.memory_space<vmem>>, %arg2: memref<128x128xf32, #tpu.memory_space<vmem>>, %arg3: memref<128x128xf32, #tpu.memory_space<vmem>>, %arg4: memref<128x128xf32, #tpu.memory_space<vmem>>, %arg5: memref<1x128xf32, #tpu.memory_space<vmem>>, %arg6: memref<1x128xf32, #tpu.memory_space<vmem>>, %arg7: memref<1x128xf32, #tpu.memory_space<vmem>>, %arg8: memref<128x128xf32, #tpu.memory_space<vmem>>, %arg9: memref<128x128xf32, #tpu.memory_space<vmem>>, %arg10: memref<1x128xf32, #tpu.memory_space<vmem>>, %arg11: memref<1x128xf32, #tpu.memory_space<vmem>>, %arg12: memref<8x128xf32, #tpu.memory_space<vmem>>) attributes {dimension_semantics = [#tpu.dimension_semantics<parallel>], iteration_bounds = array<i64: 1>, scalar_prefetch = 0 : i64, scratch_operands = 0 : i64, tpu.core_type = #tpu.core_type<tc>, window_params = [{transform_indices = @transform_0, window_bounds = array<i64: 8, 128>}, {pipeline_mode = #tpu.pipeline_mode<synchronous>, transform_indices = @transform_1, window_bounds = array<i64: 128, 128>}, {pipeline_mode = #tpu.pipeline_mode<synchronous>, transform_indices = @transform_2, window_bounds = array<i64: 128, 128>}, {pipeline_mode = #tpu.pipeline_mode<synchronous>, transform_indices = @transform_3, window_bounds = array<i64: 128, 128>}, {pipeline_mode = #tpu.pipeline_mode<synchronous>, transform_indices = @transform_4, window_bounds = array<i64: 1, 128>}, {pipeline_mode = #tpu.pipeline_mode<synchronous>, transform_indices = @transform_5, window_bounds = array<i64: 1, 128>}, {pipeline_mode = #tpu.pipeline_mode<synchronous>, transform_indices = @transform_6, window_bounds = array<i64: 1, 128>}, {pipeline_mode = #tpu.pipeline_mode<synchronous>, transform_indices = @transform_7, window_bounds = array<i64: 128, 128>}, {pipeline_mode = #tpu.pipeline_mode<synchronous>, transform_indices = @transform_8, window_bounds = array<i64: 128, 128>}, {pipeline_mode = #tpu.pipeline_mode<synchronous>, transform_indices = @transform_9, window_bounds = array<i64: 1, 128>}, {pipeline_mode = #tpu.pipeline_mode<synchronous>, transform_indices = @transform_10, window_bounds = array<i64: 1, 128>}, {transform_indices = @transform_11, window_bounds = array<i64: 8, 128>}]} {
    %c0 = arith.constant 0 : index
    %c0_0 = arith.constant 0 : index
    %0 = vector.load %arg1[%c0, %c0_0] : memref<8x128xf32, #tpu.memory_space<vmem>>, vector<8x128xf32>
    %cst = arith.constant 0.000000e+00 : f32
    %1 = vector.broadcast %cst : f32 to vector<8x128xf32>
    %c0_1 = arith.constant 0 : index
    %c0_2 = arith.constant 0 : index
    %2 = vector.load %arg8[%c0_1, %c0_2] : memref<128x128xf32, #tpu.memory_space<vmem>>, vector<128x128xf32>
    %cst_3 = arith.constant dense<0.000000e+00> : vector<8x128xf32>
    %3 = tpu.matmul %0, %2, %cst_3 {dimension_numbers = #tpu.dot_dimension_numbers<[1], [0], [0], [1], [0, 0, 1, 1], [], []>} : vector<8x128xf32>, vector<128x128xf32>, vector<8x128xf32> -> vector<8x128xf32>
    %c0_4 = arith.constant 0 : index
    %c0_5 = arith.constant 0 : index
    %4 = vector.load %arg10[%c0_4, %c0_5] : memref<1x128xf32, #tpu.memory_space<vmem>>, vector<1x128xf32>
    %5 = vector.broadcast %4 : vector<1x128xf32> to vector<8x128xf32>
    %6 = arith.addf %3, %5 : vector<8x128xf32>
    %cst_6 = arith.constant 0.000000e+00 : f32
    %7 = vector.broadcast %cst_6 : f32 to vector<8x128xf32>
    %8 = arith.maximumf %6, %7 : vector<8x128xf32>
    %9 = arith.addf %1, %8 : vector<8x128xf32>
    %c0_7 = arith.constant 0 : index
    %c0_8 = arith.constant 0 : index
    %10 = vector.load %arg2[%c0_7, %c0_8] : memref<128x128xf32, #tpu.memory_space<vmem>>, vector<128x128xf32>
    %cst_9 = arith.constant dense<0.000000e+00> : vector<8x128xf32>
    %11 = tpu.matmul %0, %10, %cst_9 {dimension_numbers = #tpu.dot_dimension_numbers<[1], [0], [0], [1], [0, 0, 1, 1], [], []>} : vector<8x128xf32>, vector<128x128xf32>, vector<8x128xf32> -> vector<8x128xf32>
    %c0_10 = arith.constant 0 : index
    %c0_11 = arith.constant 0 : index
    %12 = vector.load %arg5[%c0_10, %c0_11] : memref<1x128xf32, #tpu.memory_space<vmem>>, vector<1x128xf32>
    %13 = vector.broadcast %12 : vector<1x128xf32> to vector<8x128xf32>
    %14 = arith.addf %11, %13 : vector<8x128xf32>
    %cst_12 = arith.constant 0.000000e+00 : f32
    %15 = vector.broadcast %cst_12 : f32 to vector<8x128xf32>
    %16 = arith.maximumf %14, %15 : vector<8x128xf32>
    %c0_13 = arith.constant 0 : index
    %c0_14 = arith.constant 0 : index
    %17 = vector.load %arg9[%c0_13, %c0_14] : memref<128x128xf32, #tpu.memory_space<vmem>>, vector<128x128xf32>
    %cst_15 = arith.constant dense<0.000000e+00> : vector<8x128xf32>
    %18 = tpu.matmul %16, %17, %cst_15 {dimension_numbers = #tpu.dot_dimension_numbers<[1], [0], [0], [1], [0, 0, 1, 1], [], []>} : vector<8x128xf32>, vector<128x128xf32>, vector<8x128xf32> -> vector<8x128xf32>
    %c0_16 = arith.constant 0 : index
    %c0_17 = arith.constant 0 : index
    %19 = vector.load %arg11[%c0_16, %c0_17] : memref<1x128xf32, #tpu.memory_space<vmem>>, vector<1x128xf32>
    %20 = vector.broadcast %19 : vector<1x128xf32> to vector<8x128xf32>
    %21 = arith.addf %18, %20 : vector<8x128xf32>
    %cst_18 = arith.constant 0.000000e+00 : f32
    %22 = vector.broadcast %cst_18 : f32 to vector<8x128xf32>
    %23 = arith.maximumf %21, %22 : vector<8x128xf32>
    %24 = arith.addf %9, %23 : vector<8x128xf32>
    %c0_19 = arith.constant 0 : index
    %c0_20 = arith.constant 0 : index
    %25 = vector.load %arg3[%c0_19, %c0_20] : memref<128x128xf32, #tpu.memory_space<vmem>>, vector<128x128xf32>
    %cst_21 = arith.constant dense<0.000000e+00> : vector<8x128xf32>
    %26 = tpu.matmul %16, %25, %cst_21 {dimension_numbers = #tpu.dot_dimension_numbers<[1], [0], [0], [1], [0, 0, 1, 1], [], []>} : vector<8x128xf32>, vector<128x128xf32>, vector<8x128xf32> -> vector<8x128xf32>
    %c0_22 = arith.constant 0 : index
    %c0_23 = arith.constant 0 : index
    %27 = vector.load %arg6[%c0_22, %c0_23] : memref<1x128xf32, #tpu.memory_space<vmem>>, vector<1x128xf32>
    %28 = vector.broadcast %27 : vector<1x128xf32> to vector<8x128xf32>
    %29 = arith.addf %26, %28 : vector<8x128xf32>
    %cst_24 = arith.constant 0.000000e+00 : f32
    %30 = vector.broadcast %cst_24 : f32 to vector<8x128xf32>
    %31 = arith.maximumf %29, %30 : vector<8x128xf32>
    %c0_25 = arith.constant 0 : index
    %c0_26 = arith.constant 0 : index
    %32 = vector.load %arg4[%c0_25, %c0_26] : memref<128x128xf32, #tpu.memory_space<vmem>>, vector<128x128xf32>
    %cst_27 = arith.constant dense<0.000000e+00> : vector<8x128xf32>
    %33 = tpu.matmul %31, %32, %cst_27 {dimension_numbers = #tpu.dot_dimension_numbers<[1], [0], [0], [1], [0, 0, 1, 1], [], []>} : vector<8x128xf32>, vector<128x128xf32>, vector<8x128xf32> -> vector<8x128xf32>
    %c0_28 = arith.constant 0 : index
    %c0_29 = arith.constant 0 : index
    %34 = vector.load %arg7[%c0_28, %c0_29] : memref<1x128xf32, #tpu.memory_space<vmem>>, vector<1x128xf32>
    %35 = vector.broadcast %34 : vector<1x128xf32> to vector<8x128xf32>
    %36 = arith.addf %33, %35 : vector<8x128xf32>
    %cst_30 = arith.constant 0.000000e+00 : f32
    %37 = vector.broadcast %cst_30 : f32 to vector<8x128xf32>
    %38 = arith.maximumf %36, %37 : vector<8x128xf32>
    %39 = arith.addf %38, %24 : vector<8x128xf32>
    %c0_31 = arith.constant 0 : index
    %c0_32 = arith.constant 0 : index
    %40 = vector.load %arg12[%c0_31, %c0_32] : memref<8x128xf32, #tpu.memory_space<vmem>>, vector<8x128xf32>
    tpu.vector_store %arg12[%c0_31, %c0_32], %39 {strides = array<i32>} : memref<8x128xf32, #tpu.memory_space<vmem>>, vector<8x128xf32>,
    return
  }
  func.func @transform_0(%arg0: i32) -> (i32, i32) {
    %c0_i32 = arith.constant 0 : i32
    %c0_i32_0 = arith.constant 0 : i32
    return %arg0, %c0_i32 : i32, i32
  }
  func.func @transform_1(%arg0: i32) -> (i32, i32) {
    %c0_i32 = arith.constant 0 : i32
    %c0_i32_0 = arith.constant 0 : i32
    %c0_i32_1 = arith.constant 0 : i32
    return %c0_i32, %c0_i32_0 : i32, i32
  }
  func.func @transform_2(%arg0: i32) -> (i32, i32) {
    %c0_i32 = arith.constant 0 : i32
    %c0_i32_0 = arith.constant 0 : i32
    %c0_i32_1 = arith.constant 0 : i32
    return %c0_i32, %c0_i32_0 : i32, i32
  }
  func.func @transform_3(%arg0: i32) -> (i32, i32) {
    %c0_i32 = arith.constant 0 : i32
    %c0_i32_0 = arith.constant 0 : i32
    %c0_i32_1 = arith.constant 0 : i32
    return %c0_i32, %c0_i32_0 : i32, i32
  }
  func.func @transform_4(%arg0: i32) -> (i32, i32) {
    %c0_i32 = arith.constant 0 : i32
    %c0_i32_0 = arith.constant 0 : i32
    %c0_i32_1 = arith.constant 0 : i32
    return %c0_i32, %c0_i32_0 : i32, i32
  }
  func.func @transform_5(%arg0: i32) -> (i32, i32) {
    %c0_i32 = arith.constant 0 : i32
    %c0_i32_0 = arith.constant 0 : i32
    %c0_i32_1 = arith.constant 0 : i32
    return %c0_i32, %c0_i32_0 : i32, i32
  }
  func.func @transform_6(%arg0: i32) -> (i32, i32) {
    %c0_i32 = arith.constant 0 : i32
    %c0_i32_0 = arith.constant 0 : i32
    %c0_i32_1 = arith.constant 0 : i32
    return %c0_i32, %c0_i32_0 : i32, i32
  }
  func.func @transform_7(%arg0: i32) -> (i32, i32) {
    %c0_i32 = arith.constant 0 : i32
    %c0_i32_0 = arith.constant 0 : i32
    %c0_i32_1 = arith.constant 0 : i32
    return %c0_i32, %c0_i32_0 : i32, i32
  }
  func.func @transform_8(%arg0: i32) -> (i32, i32) {
    %c0_i32 = arith.constant 0 : i32
    %c0_i32_0 = arith.constant 0 : i32
    %c0_i32_1 = arith.constant 0 : i32
    return %c0_i32, %c0_i32_0 : i32, i32
  }
  func.func @transform_9(%arg0: i32) -> (i32, i32) {
    %c0_i32 = arith.constant 0 : i32
    %c0_i32_0 = arith.constant 0 : i32
    %c0_i32_1 = arith.constant 0 : i32
    return %c0_i32, %c0_i32_0 : i32, i32
  }
  func.func @transform_10(%arg0: i32) -> (i32, i32) {
    %c0_i32 = arith.constant 0 : i32
    %c0_i32_0 = arith.constant 0 : i32
    %c0_i32_1 = arith.constant 0 : i32
    return %c0_i32, %c0_i32_0 : i32, i32
  }
  func.func @transform_11(%arg0: i32) -> (i32, i32) {
    %c0_i32 = arith.constant 0 : i32
    %c0_i32_0 = arith.constant 0 : i32
    return %arg0, %c0_i32 : i32, i32
  }
}

</mosaic_0001>

<llo_original>
// kernel: _mlp_forward_impl.1
$region0: #{_mlp_forward_impl.1}
  #allocation0 [shape = 'u32[]', space=smem, size = 0x4, offset = 0x4, fixed_abs, tag = 'smem constant byte address 0x4 - core index']
  #allocation1 [shape = 'u32[144,128]{1,0:T(1,128)}', space=vmem, size = 0x12000, scoped, tag = 'internal scratch']
  %s0 = inlined_call_operand.vmem [shape: f32[8,128], index: 0, kind: input, shape index: {}]
  %s1 = inlined_call_operand.hbm [shape: f32[128,128], index: 1, kind: input, shape index: {}]
  %s2 = inlined_call_operand.hbm [shape: f32[128,128], index: 2, kind: input, shape index: {}]
  %s3 = inlined_call_operand.hbm [shape: f32[128,128], index: 3, kind: input, shape index: {}]
  %s4 = inlined_call_operand.vmem [shape: f32[1,128], index: 4, kind: input, shape index: {}]
  %s5 = inlined_call_operand.vmem [shape: f32[1,128], index: 5, kind: input, shape index: {}]
  %s6 = inlined_call_operand.vmem [shape: f32[1,128], index: 6, kind: input, shape index: {}]
  %s7 = inlined_call_operand.hbm [shape: f32[128,128], index: 7, kind: input, shape index: {}]
  %s8 = inlined_call_operand.hbm [shape: f32[128,128], index: 8, kind: input, shape index: {}]
  %s9 = inlined_call_operand.vmem [shape: f32[1,128], index: 9, kind: input, shape index: {}]
  %s10 = inlined_call_operand.vmem [shape: f32[1,128], index: 10, kind: input, shape index: {}]
  %s11 = inlined_call_operand.vmem [shape: f32[8,128], index: 11, kind: output, shape index: {}]
  %s12 = sld [smem:[#allocation0]]
  $region74: #{_mlp_forward_impl.1} parent=0
    _
  %s14 = ssub.s32 1, %s12
  %s15 = scalar_select 0, %s14, %s12
  $region1: #{_mlp_forward_impl.1} parent=0
    #allocation2 [shape = 'u8[65536]{0}', space=vmem, size = 0x10000, scoped, tag = 'input window, operand 1, single buffered']
    #allocation3 [shape = 's32[1]{0}', space=sflag, size = 0x4, scoped, tag = 'scoped memory for _mlp_forward_impl.1']
    #allocation4 [shape = 'u8[65536]{0}', space=vmem, size = 0x10000, scoped, tag = 'input window, operand 2, single buffered']
    #allocation5 [shape = 's32[1]{0}', space=sflag, size = 0x4, scoped, tag = 'scoped memory for _mlp_forward_impl.1']
    #allocation6 [shape = 'u8[65536]{0}', space=vmem, size = 0x10000, scoped, tag = 'input window, operand 3, single buffered']
    #allocation7 [shape = 'u8[65536]{0}', space=vmem, size = 0x10000, scoped, tag = 'input window, operand 7, single buffered']
    #allocation8 [shape = 's32[1]{0}', space=sflag, size = 0x4, scoped, tag = 'scoped memory for _mlp_forward_impl.1']
    #allocation9 [shape = 'u8[65536]{0}', space=vmem, size = 0x10000, scoped, tag = 'input window, operand 8, single buffered']
    %16 = vsyncpa [#allocation3], 0
    %17 = vsyncpa [#allocation5], 0
    %18 = vsyncpa [#allocation8], 0
    // Predicated region
    $region2: #{_mlp_forward_impl.1} parent=1 // pred_check
      _
    $region3: #{_mlp_forward_impl.1} parent=1 // pred_check_branch
      %20 = sbr.rel (0) target = $region5
    $region4: #{_mlp_forward_impl.1} parent=1 // pred_region
      _
    $region5: #{_mlp_forward_impl.1} parent=1 // pred_fallthru
      _
    // Predicated region
    $region6: #{_mlp_forward_impl.1} parent=1 // pred_check
      _
    $region7: #{_mlp_forward_impl.1} parent=1 // pred_check_branch
      %22 = sbr.rel (0) target = $region9
    $region8: #{_mlp_forward_impl.1} parent=1 // pred_region
      %s24 = ssub.s32 2048, 2048
      %25 = vsyncadd [#allocation3], %s24
      %s26 = sshll.u32 [#allocation2], 4
      %s27 = int_to_ptr.vmem [resolvable:$true] %s26
      %32 = dma.hbm_to_vmem [thread:$0]  %s1, 2048, %s27, [#allocation3], 128, 128, 8
    $region9: #{_mlp_forward_impl.1} parent=1 // pred_fallthru
      _
    // Predicated region
    $region10: #{_mlp_forward_impl.1} parent=1 // pred_check
      _
    $region11: #{_mlp_forward_impl.1} parent=1 // pred_check_branch
      %34 = sbr.rel (0) target = $region13
    $region12: #{_mlp_forward_impl.1} parent=1 // pred_region
      %s36 = ssub.s32 2048, 2048
      %37 = vsyncadd [#allocation5], %s36
      %s38 = sshll.u32 [#allocation4], 4
      %s39 = int_to_ptr.vmem [resolvable:$true] %s38
      %44 = dma.hbm_to_vmem [thread:$0]  %s2, 2048, %s39, [#allocation5], 128, 128, 8
    $region13: #{_mlp_forward_impl.1} parent=1 // pred_fallthru
      _
    // Predicated region
    $region14: #{_mlp_forward_impl.1} parent=1 // pred_check
      _
    $region15: #{_mlp_forward_impl.1} parent=1 // pred_check_branch
      %46 = sbr.rel (0) target = $region17
    $region16: #{_mlp_forward_impl.1} parent=1 // pred_region
      %s48 = ssub.s32 2048, 2048
      %49 = vsyncadd [#allocation5], %s48
      %s50 = sshll.u32 [#allocation6], 4
      %s51 = int_to_ptr.vmem [resolvable:$true] %s50
      %56 = dma.hbm_to_vmem [thread:$0]  %s3, 2048, %s51, [#allocation5], 128, 128, 8
    $region17: #{_mlp_forward_impl.1} parent=1 // pred_fallthru
      _
    // Predicated region
    $region18: #{_mlp_forward_impl.1} parent=1 // pred_check
      _
    $region19: #{_mlp_forward_impl.1} parent=1 // pred_check_branch
      %58 = sbr.rel (0) target = $region21
    $region20: #{_mlp_forward_impl.1} parent=1 // pred_region
      _
    $region21: #{_mlp_forward_impl.1} parent=1 // pred_fallthru
      _
    // Predicated region
    $region22: #{_mlp_forward_impl.1} parent=1 // pred_check
      _
    $region23: #{_mlp_forward_impl.1} parent=1 // pred_check_branch
      %60 = sbr.rel (0) target = $region25
    $region24: #{_mlp_forward_impl.1} parent=1 // pred_region
      _
    $region25: #{_mlp_forward_impl.1} parent=1 // pred_fallthru
      _
    // Predicated region
    $region26: #{_mlp_forward_impl.1} parent=1 // pred_check
      _
    $region27: #{_mlp_forward_impl.1} parent=1 // pred_check_branch
      %62 = sbr.rel (0) target = $region29
    $region28: #{_mlp_forward_impl.1} parent=1 // pred_region
      _
    $region29: #{_mlp_forward_impl.1} parent=1 // pred_fallthru
      _
    // Predicated region
    $region30: #{_mlp_forward_impl.1} parent=1 // pred_check
      _
    $region31: #{_mlp_forward_impl.1} parent=1 // pred_check_branch
      %64 = sbr.rel (0) target = $region33
    $region32: #{_mlp_forward_impl.1} parent=1 // pred_region
      %s66 = ssub.s32 2048, 2048
      %67 = vsyncadd [#allocation8], %s66
      %s68 = sshll.u32 [#allocation7], 4
      %s69 = int_to_ptr.vmem [resolvable:$true] %s68
      %74 = dma.hbm_to_vmem [thread:$0]  %s7, 2048, %s69, [#allocation8], 128, 128, 8
    $region33: #{_mlp_forward_impl.1} parent=1 // pred_fallthru
      _
    // Predicated region
    $region34: #{_mlp_forward_impl.1} parent=1 // pred_check
      _
    $region35: #{_mlp_forward_impl.1} parent=1 // pred_check_branch
      %76 = sbr.rel (0) target = $region37
    $region36: #{_mlp_forward_impl.1} parent=1 // pred_region
      %s78 = ssub.s32 2048, 2048
      %79 = vsyncadd [#allocation8], %s78
      %s80 = sshll.u32 [#allocation9], 4
      %s81 = int_to_ptr.vmem [resolvable:$true] %s80
      %86 = dma.hbm_to_vmem [thread:$0]  %s8, 2048, %s81, [#allocation8], 128, 128, 8
    $region37: #{_mlp_forward_impl.1} parent=1 // pred_fallthru
      _
    // Predicated region
    $region38: #{_mlp_forward_impl.1} parent=1 // pred_check
      _
    $region39: #{_mlp_forward_impl.1} parent=1 // pred_check_branch
      %88 = sbr.rel (0) target = $region41
    $region40: #{_mlp_forward_impl.1} parent=1 // pred_region
      _
    $region41: #{_mlp_forward_impl.1} parent=1 // pred_fallthru
      _
    // Predicated region
    $region42: #{_mlp_forward_impl.1} parent=1 // pred_check
      _
    $region43: #{_mlp_forward_impl.1} parent=1 // pred_check_branch
      %90 = sbr.rel (0) target = $region45
    $region44: #{_mlp_forward_impl.1} parent=1 // pred_region
      _
    $region45: #{_mlp_forward_impl.1} parent=1 // pred_fallthru
      _
    // Predicated region
    $region46: #{_mlp_forward_impl.1} parent=1 // pred_check
      _
    $region47: #{_mlp_forward_impl.1} parent=1 // pred_check_branch
      %92 = sbr.rel (0) target = $region49
    $region48: #{_mlp_forward_impl.1} parent=1 // pred_region
      %93 = dma.done [#allocation3], 2048
    $region49: #{_mlp_forward_impl.1} parent=1 // pred_fallthru
      _
    // Predicated region
    $region50: #{_mlp_forward_impl.1} parent=1 // pred_check
      _
    $region51: #{_mlp_forward_impl.1} parent=1 // pred_check_branch
      %95 = sbr.rel (0) target = $region53
    $region52: #{_mlp_forward_impl.1} parent=1 // pred_region
      %96 = dma.done [#allocation5], 2048
    $region53: #{_mlp_forward_impl.1} parent=1 // pred_fallthru
      _
    // Predicated region
    $region54: #{_mlp_forward_impl.1} parent=1 // pred_check
      _
    $region55: #{_mlp_forward_impl.1} parent=1 // pred_check_branch
      %98 = sbr.rel (0) target = $region57
    $region56: #{_mlp_forward_impl.1} parent=1 // pred_region
      %99 = dma.done [#allocation5], 2048
    $region57: #{_mlp_forward_impl.1} parent=1 // pred_fallthru
      _
    // Predicated region
    $region58: #{_mlp_forward_impl.1} parent=1 // pred_check
      _
    $region59: #{_mlp_forward_impl.1} parent=1 // pred_check_branch
      %101 = sbr.rel (0) target = $region61
    $region60: #{_mlp_forward_impl.1} parent=1 // pred_region
      %102 = dma.done [#allocation8], 2048
    $region61: #{_mlp_forward_impl.1} parent=1 // pred_fallthru
      _
    // Predicated region
    $region62: #{_mlp_forward_impl.1} parent=1 // pred_check
      _
    $region63: #{_mlp_forward_impl.1} parent=1 // pred_check_branch
      %104 = sbr.rel (0) target = $region65
    $region64: #{_mlp_forward_impl.1} parent=1 // pred_region
      %105 = dma.done [#allocation8], 2048
    $region65: #{_mlp_forward_impl.1} parent=1 // pred_fallthru
      _
    %v106 = vld [vmem:[%s0] sm:$0xff]
    %v107 = vld [vmem:[#allocation7] sm:$0xff]
    %v108 = vld [vmem:[#allocation7 + $0x8] sm:$0xff]
    %v109 = vld [vmem:[#allocation7 + $0x10] sm:$0xff]
    %v110 = vld [vmem:[#allocation7 + $0x18] sm:$0xff]
    %v111 = vld [vmem:[#allocation7 + $0x20] sm:$0xff]
    %v112 = vld [vmem:[#allocation7 + $0x28] sm:$0xff]
    %v113 = vld [vmem:[#allocation7 + $0x30] sm:$0xff]
    %v114 = vld [vmem:[#allocation7 + $0x38] sm:$0xff]
    %v115 = vld [vmem:[#allocation7 + $0x40] sm:$0xff]
    %v116 = vld [vmem:[#allocation7 + $0x48] sm:$0xff]
    %v117 = vld [vmem:[#allocation7 + $0x50] sm:$0xff]
    %v118 = vld [vmem:[#allocation7 + $0x58] sm:$0xff]
    %v119 = vld [vmem:[#allocation7 + $0x60] sm:$0xff]
    %v120 = vld [vmem:[#allocation7 + $0x68] sm:$0xff]
    %v121 = vld [vmem:[#allocation7 + $0x70] sm:$0xff]
    %v122 = vld [vmem:[#allocation7 + $0x78] sm:$0xff]
    %v123 = vld [vmem:[%s9] sm:$0x1]
    %v125 = vlaneseq
    %v126 = vshrl.u32 %v125, 7
    %v127 = vsub.s32 0, %v126
    %v128 = vrot.slane %v123, %v127
    %130 = vmatprep.subr.mxu0 0.0
    %131 = vmatpush1.msra.mxu0 %v107
    %132 = vmatprep.subr.mxu0 0.0
    %133 = vmatpush1.msra.mxu0 %v108
    %134 = vmatprep.subr.mxu0 0.0
    %135 = vmatpush1.msra.mxu0 %v109
    %136 = vmatprep.subr.mxu0 0.0
    %137 = vmatpush1.msra.mxu0 %v110
    %138 = vmatprep.subr.mxu0 0.0
    %139 = vmatpush1.msra.mxu0 %v111
    %140 = vmatprep.subr.mxu0 0.0
    %141 = vmatpush1.msra.mxu0 %v112
    %142 = vmatprep.subr.mxu0 0.0
    %143 = vmatpush1.msra.mxu0 %v113
    %144 = vmatprep.subr.mxu0 0.0
    %145 = vmatpush1.msra.mxu0 %v114
    %146 = vmatprep.subr.mxu0 0.0
    %147 = vmatpush1.msra.mxu0 %v115
    %148 = vmatprep.subr.mxu0 0.0
    %149 = vmatpush1.msra.mxu0 %v116
    %150 = vmatprep.subr.mxu0 0.0
    %151 = vmatpush1.msra.mxu0 %v117
    %152 = vmatprep.subr.mxu0 0.0
    %153 = vmatpush1.msra.mxu0 %v118
    %154 = vmatprep.subr.mxu0 0.0
    %155 = vmatpush1.msra.mxu0 %v119
    %156 = vmatprep.subr.mxu0 0.0
    %157 = vmatpush1.msra.mxu0 %v120
    %158 = vmatprep.subr.mxu0 0.0
    %159 = vmatpush1.msra.mxu0 %v121
    %160 = vmatprep.subr.mxu0 0.0
    %161 = vmatpush1.msra.mxu0 %v122
    %162 = vmatprep.subr.mxu0 0.0
    %163 = vmatpush1.msra.mxu0 0.0
    %164 = vmatprep.subr.mxu0 0.0
    %165 = vmatpush1.msra.mxu0 0.0
    %166 = vmatprep.subr.mxu0 0.0
    %167 = vmatpush1.msra.mxu0 0.0
    %168 = vmatprep.subr.mxu0 0.0
    %169 = vmatpush1.msra.mxu0 0.0
    %170 = vmatprep.subr.mxu0 0.0
    %171 = vmatpush1.msra.mxu0 0.0
    %172 = vmatprep.subr.mxu0 0.0
    %173 = vmatpush1.msra.mxu0 0.0
    %174 = vmatprep.subr.mxu0 0.0
    %175 = vmatpush1.msra.mxu0 0.0
    %176 = vmatprep.subr.mxu0 0.0
    %177 = vmatpush1.msra.mxu0 0.0
    %178 = vmatprep.subr.mxu0 0.0
    %179 = vmatpush1.msra.mxu0 0.0
    %180 = vmatprep.subr.mxu0 0.0
    %181 = vmatpush1.msra.mxu0 0.0
    %182 = vmatprep.subr.mxu0 0.0
    %183 = vmatpush1.msra.mxu0 0.0
    %184 = vmatprep.subr.mxu0 0.0
    %185 = vmatpush1.msra.mxu0 0.0
    %186 = vmatprep.subr.mxu0 0.0
    %187 = vmatpush1.msra.mxu0 0.0
    %188 = vmatprep.subr.mxu0 0.0
    %189 = vmatpush1.msra.mxu0 0.0
    %190 = vmatprep.subr.mxu0 0.0
    %191 = vmatpush1.msra.mxu0 0.0
    %192 = vmatprep.subr.mxu0 0.0
    %193 = vmatpush1.msra.mxu0 0.0
    %194 = vmatprep.mubr.f32.mxu0 0.0
    %195 = vmatmul.mubr.f32.gmra.mrb[0].mxu0 %v106
    %v196 = vpop.f32.mrb[0].mxu0
    %v197 = vadd.f32 %v128, %v196
    %v198 = vpop.f32.mrb[0].mxu0
    %199 = vdwg.mxu0
    %v200 = vmax.f32 %v197, 0.0
    %v201 = vadd.f32 %v200, 0.0
    %v202 = vld [vmem:[#allocation2] sm:$0xff]
    %v203 = vld [vmem:[#allocation2 + $0x8] sm:$0xff]
    %v204 = vld [vmem:[#allocation2 + $0x10] sm:$0xff]
    %v205 = vld [vmem:[#allocation2 + $0x18] sm:$0xff]
    %v206 = vld [vmem:[#allocation2 + $0x20] sm:$0xff]
    %v207 = vld [vmem:[#allocation2 + $0x28] sm:$0xff]
    %v208 = vld [vmem:[#allocation2 + $0x30] sm:$0xff]
    %v209 = vld [vmem:[#allocation2 + $0x38] sm:$0xff]
    %v210 = vld [vmem:[#allocation2 + $0x40] sm:$0xff]
    %v211 = vld [vmem:[#allocation2 + $0x48] sm:$0xff]
    %v212 = vld [vmem:[#allocation2 + $0x50] sm:$0xff]
    %v213 = vld [vmem:[#allocation2 + $0x58] sm:$0xff]
    %v214 = vld [vmem:[#allocation2 + $0x60] sm:$0xff]
    %v215 = vld [vmem:[#allocation2 + $0x68] sm:$0xff]
    %v216 = vld [vmem:[#allocation2 + $0x70] sm:$0xff]
    %v217 = vld [vmem:[#allocation2 + $0x78] sm:$0xff]
    %v218 = vld [vmem:[%s4] sm:$0x1]
    %v220 = vlaneseq
    %v221 = vshrl.u32 %v220, 7
    %v222 = vsub.s32 0, %v221
    %v223 = vrot.slane %v218, %v222
    %225 = vmatprep.subr.mxu0 0.0
    %226 = vmatpush1.msra.mxu0 %v202
    %227 = vmatprep.subr.mxu0 0.0
    %228 = vmatpush1.msra.mxu0 %v203
    %229 = vmatprep.subr.mxu0 0.0
    %230 = vmatpush1.msra.mxu0 %v204
    %231 = vmatprep.subr.mxu0 0.0
    %232 = vmatpush1.msra.mxu0 %v205
    %233 = vmatprep.subr.mxu0 0.0
    %234 = vmatpush1.msra.mxu0 %v206
    %235 = vmatprep.subr.mxu0 0.0
    %236 = vmatpush1.msra.mxu0 %v207
    %237 = vmatprep.subr.mxu0 0.0
    %238 = vmatpush1.msra.mxu0 %v208
    %239 = vmatprep.subr.mxu0 0.0
    %240 = vmatpush1.msra.mxu0 %v209
    %241 = vmatprep.subr.mxu0 0.0
    %242 = vmatpush1.msra.mxu0 %v210
    %243 = vmatprep.subr.mxu0 0.0
    %244 = vmatpush1.msra.mxu0 %v211
    %245 = vmatprep.subr.mxu0 0.0
    %246 = vmatpush1.msra.mxu0 %v212
    %247 = vmatprep.subr.mxu0 0.0
    %248 = vmatpush1.msra.mxu0 %v213
    %249 = vmatprep.subr.mxu0 0.0
    %250 = vmatpush1.msra.mxu0 %v214
    %251 = vmatprep.subr.mxu0 0.0
    %252 = vmatpush1.msra.mxu0 %v215
    %253 = vmatprep.subr.mxu0 0.0
    %254 = vmatpush1.msra.mxu0 %v216
    %255 = vmatprep.subr.mxu0 0.0
    %256 = vmatpush1.msra.mxu0 %v217
    %257 = vmatprep.subr.mxu0 0.0
    %258 = vmatpush1.msra.mxu0 0.0
    %259 = vmatprep.subr.mxu0 0.0
    %260 = vmatpush1.msra.mxu0 0.0
    %261 = vmatprep.subr.mxu0 0.0
    %262 = vmatpush1.msra.mxu0 0.0
    %263 = vmatprep.subr.mxu0 0.0
    %264 = vmatpush1.msra.mxu0 0.0
    %265 = vmatprep.subr.mxu0 0.0
    %266 = vmatpush1.msra.mxu0 0.0
    %267 = vmatprep.subr.mxu0 0.0
    %268 = vmatpush1.msra.mxu0 0.0
    %269 = vmatprep.subr.mxu0 0.0
    %270 = vmatpush1.msra.mxu0 0.0
    %271 = vmatprep.subr.mxu0 0.0
    %272 = vmatpush1.msra.mxu0 0.0
    %273 = vmatprep.subr.mxu0 0.0
    %274 = vmatpush1.msra.mxu0 0.0
    %275 = vmatprep.subr.mxu0 0.0
    %276 = vmatpush1.msra.mxu0 0.0
    %277 = vmatprep.subr.mxu0 0.0
    %278 = vmatpush1.msra.mxu0 0.0
    %279 = vmatprep.subr.mxu0 0.0
    %280 = vmatpush1.msra.mxu0 0.0
    %281 = vmatprep.subr.mxu0 0.0
    %282 = vmatpush1.msra.mxu0 0.0
    %283 = vmatprep.subr.mxu0 0.0
    %284 = vmatpush1.msra.mxu0 0.0
    %285 = vmatprep.subr.mxu0 0.0
    %286 = vmatpush1.msra.mxu0 0.0
    %287 = vmatprep.subr.mxu0 0.0
    %288 = vmatpush1.msra.mxu0 0.0
    %289 = vmatprep.mubr.f32.mxu0 0.0
    %290 = vmatmul.mubr.f32.gmra.mrb[0].mxu0 %v106
    %v291 = vpop.f32.mrb[0].mxu0
    %v292 = vadd.f32 %v223, %v291
    %v293 = vpop.f32.mrb[0].mxu0
    %294 = vdwg.mxu0
    %v295 = vmax.f32 %v292, 0.0
    %v296 = vld [vmem:[#allocation9] sm:$0xff]
    %v297 = vld [vmem:[#allocation9 + $0x8] sm:$0xff]
    %v298 = vld [vmem:[#allocation9 + $0x10] sm:$0xff]
    %v299 = vld [vmem:[#allocation9 + $0x18] sm:$0xff]
    %v300 = vld [vmem:[#allocation9 + $0x20] sm:$0xff]
    %v301 = vld [vmem:[#allocation9 + $0x28] sm:$0xff]
    %v302 = vld [vmem:[#allocation9 + $0x30] sm:$0xff]
    %v303 = vld [vmem:[#allocation9 + $0x38] sm:$0xff]
    %v304 = vld [vmem:[#allocation9 + $0x40] sm:$0xff]
    %v305 = vld [vmem:[#allocation9 + $0x48] sm:$0xff]
    %v306 = vld [vmem:[#allocation9 + $0x50] sm:$0xff]
    %v307 = vld [vmem:[#allocation9 + $0x58] sm:$0xff]
    %v308 = vld [vmem:[#allocation9 + $0x60] sm:$0xff]
    %v309 = vld [vmem:[#allocation9 + $0x68] sm:$0xff]
    %v310 = vld [vmem:[#allocation9 + $0x70] sm:$0xff]
    %v311 = vld [vmem:[#allocation9 + $0x78] sm:$0xff]
    %v312 = vld [vmem:[%s10] sm:$0x1]
    %v314 = vlaneseq
    %v315 = vshrl.u32 %v314, 7
    %v316 = vsub.s32 0, %v315
    %v317 = vrot.slane %v312, %v316
    %319 = vmatprep.subr.mxu0 0.0
    %320 = vmatpush1.msra.mxu0 %v296
    %321 = vmatprep.subr.mxu0 0.0
    %322 = vmatpush1.msra.mxu0 %v297
    %323 = vmatprep.subr.mxu0 0.0
    %324 = vmatpush1.msra.mxu0 %v298
    %325 = vmatprep.subr.mxu0 0.0
    %326 = vmatpush1.msra.mxu0 %v299
    %327 = vmatprep.subr.mxu0 0.0
    %328 = vmatpush1.msra.mxu0 %v300
    %329 = vmatprep.subr.mxu0 0.0
    %330 = vmatpush1.msra.mxu0 %v301
    %331 = vmatprep.subr.mxu0 0.0
    %332 = vmatpush1.msra.mxu0 %v302
    %333 = vmatprep.subr.mxu0 0.0
    %334 = vmatpush1.msra.mxu0 %v303
    %335 = vmatprep.subr.mxu0 0.0
    %336 = vmatpush1.msra.mxu0 %v304
    %337 = vmatprep.subr.mxu0 0.0
    %338 = vmatpush1.msra.mxu0 %v305
    %339 = vmatprep.subr.mxu0 0.0
    %340 = vmatpush1.msra.mxu0 %v306
    %341 = vmatprep.subr.mxu0 0.0
    %342 = vmatpush1.msra.mxu0 %v307
    %343 = vmatprep.subr.mxu0 0.0
    %344 = vmatpush1.msra.mxu0 %v308
    %345 = vmatprep.subr.mxu0 0.0
    %346 = vmatpush1.msra.mxu0 %v309
    %347 = vmatprep.subr.mxu0 0.0
    %348 = vmatpush1.msra.mxu0 %v310
    %349 = vmatprep.subr.mxu0 0.0
    %350 = vmatpush1.msra.mxu0 %v311
    %351 = vmatprep.subr.mxu0 0.0
    %352 = vmatpush1.msra.mxu0 0.0
    %353 = vmatprep.subr.mxu0 0.0
    %354 = vmatpush1.msra.mxu0 0.0
    %355 = vmatprep.subr.mxu0 0.0
    %356 = vmatpush1.msra.mxu0 0.0
    %357 = vmatprep.subr.mxu0 0.0
    %358 = vmatpush1.msra.mxu0 0.0
    %359 = vmatprep.subr.mxu0 0.0
    %360 = vmatpush1.msra.mxu0 0.0
    %361 = vmatprep.subr.mxu0 0.0
    %362 = vmatpush1.msra.mxu0 0.0
    %363 = vmatprep.subr.mxu0 0.0
    %364 = vmatpush1.msra.mxu0 0.0
    %365 = vmatprep.subr.mxu0 0.0
    %366 = vmatpush1.msra.mxu0 0.0
    %367 = vmatprep.subr.mxu0 0.0
    %368 = vmatpush1.msra.mxu0 0.0
    %369 = vmatprep.subr.mxu0 0.0
    %370 = vmatpush1.msra.mxu0 0.0
    %371 = vmatprep.subr.mxu0 0.0
    %372 = vmatpush1.msra.mxu0 0.0
    %373 = vmatprep.subr.mxu0 0.0
    %374 = vmatpush1.msra.mxu0 0.0
    %375 = vmatprep.subr.mxu0 0.0
    %376 = vmatpush1.msra.mxu0 0.0
    %377 = vmatprep.subr.mxu0 0.0
    %378 = vmatpush1.msra.mxu0 0.0
    %379 = vmatprep.subr.mxu0 0.0
    %380 = vmatpush1.msra.mxu0 0.0
    %381 = vmatprep.subr.mxu0 0.0
    %382 = vmatpush1.msra.mxu0 0.0
    %383 = vmatprep.mubr.f32.mxu0 0.0
    %384 = vmatmul.mubr.f32.gmra.mrb[0].mxu0 %v295
    %v385 = vpop.f32.mrb[0].mxu0
    %v386 = vadd.f32 %v317, %v385
    %v387 = vpop.f32.mrb[0].mxu0
    %388 = vdwg.mxu0
    %v389 = vmax.f32 %v386, 0.0
    %v390 = vadd.f32 %v201, %v389
    %v391 = vld [vmem:[#allocation4] sm:$0xff]
    %v392 = vld [vmem:[#allocation4 + $0x8] sm:$0xff]
    %v393 = vld [vmem:[#allocation4 + $0x10] sm:$0xff]
    %v394 = vld [vmem:[#allocation4 + $0x18] sm:$0xff]
    %v395 = vld [vmem:[#allocation4 + $0x20] sm:$0xff]
    %v396 = vld [vmem:[#allocation4 + $0x28] sm:$0xff]
    %v397 = vld [vmem:[#allocation4 + $0x30] sm:$0xff]
    %v398 = vld [vmem:[#allocation4 + $0x38] sm:$0xff]
    %v399 = vld [vmem:[#allocation4 + $0x40] sm:$0xff]
    %v400 = vld [vmem:[#allocation4 + $0x48] sm:$0xff]
    %v401 = vld [vmem:[#allocation4 + $0x50] sm:$0xff]
    %v402 = vld [vmem:[#allocation4 + $0x58] sm:$0xff]
    %v403 = vld [vmem:[#allocation4 + $0x60] sm:$0xff]
    %v404 = vld [vmem:[#allocation4 + $0x68] sm:$0xff]
    %v405 = vld [vmem:[#allocation4 + $0x70] sm:$0xff]
    %v406 = vld [vmem:[#allocation4 + $0x78] sm:$0xff]
    %v407 = vld [vmem:[%s5] sm:$0x1]
    %v409 = vlaneseq
    %v410 = vshrl.u32 %v409, 7
    %v411 = vsub.s32 0, %v410
    %v412 = vrot.slane %v407, %v411
    %414 = vmatprep.subr.mxu0 0.0
    %415 = vmatpush1.msra.mxu0 %v391
    %416 = vmatprep.subr.mxu0 0.0
    %417 = vmatpush1.msra.mxu0 %v392
    %418 = vmatprep.subr.mxu0 0.0
    %419 = vmatpush1.msra.mxu0 %v393
    %420 = vmatprep.subr.mxu0 0.0
    %421 = vmatpush1.msra.mxu0 %v394
    %422 = vmatprep.subr.mxu0 0.0
    %423 = vmatpush1.msra.mxu0 %v395
    %424 = vmatprep.subr.mxu0 0.0
    %425 = vmatpush1.msra.mxu0 %v396
    %426 = vmatprep.subr.mxu0 0.0
    %427 = vmatpush1.msra.mxu0 %v397
    %428 = vmatprep.subr.mxu0 0.0
    %429 = vmatpush1.msra.mxu0 %v398
    %430 = vmatprep.subr.mxu0 0.0
    %431 = vmatpush1.msra.mxu0 %v399
    %432 = vmatprep.subr.mxu0 0.0
    %433 = vmatpush1.msra.mxu0 %v400
    %434 = vmatprep.subr.mxu0 0.0
    %435 = vmatpush1.msra.mxu0 %v401
    %436 = vmatprep.subr.mxu0 0.0
    %437 = vmatpush1.msra.mxu0 %v402
    %438 = vmatprep.subr.mxu0 0.0
    %439 = vmatpush1.msra.mxu0 %v403
    %440 = vmatprep.subr.mxu0 0.0
    %441 = vmatpush1.msra.mxu0 %v404
    %442 = vmatprep.subr.mxu0 0.0
    %443 = vmatpush1.msra.mxu0 %v405
    %444 = vmatprep.subr.mxu0 0.0
    %445 = vmatpush1.msra.mxu0 %v406
    %446 = vmatprep.subr.mxu0 0.0
    %447 = vmatpush1.msra.mxu0 0.0
    %448 = vmatprep.subr.mxu0 0.0
    %449 = vmatpush1.msra.mxu0 0.0
    %450 = vmatprep.subr.mxu0 0.0
    %451 = vmatpush1.msra.mxu0 0.0
    %452 = vmatprep.subr.mxu0 0.0
    %453 = vmatpush1.msra.mxu0 0.0
    %454 = vmatprep.subr.mxu0 0.0
    %455 = vmatpush1.msra.mxu0 0.0
    %456 = vmatprep.subr.mxu0 0.0
    %457 = vmatpush1.msra.mxu0 0.0
    %458 = vmatprep.subr.mxu0 0.0
    %459 = vmatpush1.msra.mxu0 0.0
    %460 = vmatprep.subr.mxu0 0.0
    %461 = vmatpush1.msra.mxu0 0.0
    %462 = vmatprep.subr.mxu0 0.0
    %463 = vmatpush1.msra.mxu0 0.0
    %464 = vmatprep.subr.mxu0 0.0
    %465 = vmatpush1.msra.mxu0 0.0
    %466 = vmatprep.subr.mxu0 0.0
    %467 = vmatpush1.msra.mxu0 0.0
    %468 = vmatprep.subr.mxu0 0.0
    %469 = vmatpush1.msra.mxu0 0.0
    %470 = vmatprep.subr.mxu0 0.0
    %471 = vmatpush1.msra.mxu0 0.0
    %472 = vmatprep.subr.mxu0 0.0
    %473 = vmatpush1.msra.mxu0 0.0
    %474 = vmatprep.subr.mxu0 0.0
    %475 = vmatpush1.msra.mxu0 0.0
    %476 = vmatprep.subr.mxu0 0.0
    %477 = vmatpush1.msra.mxu0 0.0
    %478 = vmatprep.mubr.f32.mxu0 0.0
    %479 = vmatmul.mubr.f32.gmra.mrb[0].mxu0 %v295
    %v480 = vpop.f32.mrb[0].mxu0
    %v481 = vadd.f32 %v412, %v480
    %v482 = vpop.f32.mrb[0].mxu0
    %483 = vdwg.mxu0
    %v484 = vmax.f32 %v481, 0.0
    %v485 = vld [vmem:[#allocation6] sm:$0xff]
    %v486 = vld [vmem:[#allocation6 + $0x8] sm:$0xff]
    %v487 = vld [vmem:[#allocation6 + $0x10] sm:$0xff]
    %v488 = vld [vmem:[#allocation6 + $0x18] sm:$0xff]
    %v489 = vld [vmem:[#allocation6 + $0x20] sm:$0xff]
    %v490 = vld [vmem:[#allocation6 + $0x28] sm:$0xff]
    %v491 = vld [vmem:[#allocation6 + $0x30] sm:$0xff]
    %v492 = vld [vmem:[#allocation6 + $0x38] sm:$0xff]
    %v493 = vld [vmem:[#allocation6 + $0x40] sm:$0xff]
    %v494 = vld [vmem:[#allocation6 + $0x48] sm:$0xff]
    %v495 = vld [vmem:[#allocation6 + $0x50] sm:$0xff]
    %v496 = vld [vmem:[#allocation6 + $0x58] sm:$0xff]
    %v497 = vld [vmem:[#allocation6 + $0x60] sm:$0xff]
    %v498 = vld [vmem:[#allocation6 + $0x68] sm:$0xff]
    %v499 = vld [vmem:[#allocation6 + $0x70] sm:$0xff]
    %v500 = vld [vmem:[#allocation6 + $0x78] sm:$0xff]
    %v501 = vld [vmem:[%s6] sm:$0x1]
    %v503 = vlaneseq
    %v504 = vshrl.u32 %v503, 7
    %v505 = vsub.s32 0, %v504
    %v506 = vrot.slane %v501, %v505
    %508 = vmatprep.subr.mxu0 0.0
    %509 = vmatpush1.msra.mxu0 %v485
    %510 = vmatprep.subr.mxu0 0.0
    %511 = vmatpush1.msra.mxu0 %v486
    %512 = vmatprep.subr.mxu0 0.0
    %513 = vmatpush1.msra.mxu0 %v487
    %514 = vmatprep.subr.mxu0 0.0
    %515 = vmatpush1.msra.mxu0 %v488
    %516 = vmatprep.subr.mxu0 0.0
    %517 = vmatpush1.msra.mxu0 %v489
    %518 = vmatprep.subr.mxu0 0.0
    %519 = vmatpush1.msra.mxu0 %v490
    %520 = vmatprep.subr.mxu0 0.0
    %521 = vmatpush1.msra.mxu0 %v491
    %522 = vmatprep.subr.mxu0 0.0
    %523 = vmatpush1.msra.mxu0 %v492
    %524 = vmatprep.subr.mxu0 0.0
    %525 = vmatpush1.msra.mxu0 %v493
    %526 = vmatprep.subr.mxu0 0.0
    %527 = vmatpush1.msra.mxu0 %v494
    %528 = vmatprep.subr.mxu0 0.0
    %529 = vmatpush1.msra.mxu0 %v495
    %530 = vmatprep.subr.mxu0 0.0
    %531 = vmatpush1.msra.mxu0 %v496
    %532 = vmatprep.subr.mxu0 0.0
    %533 = vmatpush1.msra.mxu0 %v497
    %534 = vmatprep.subr.mxu0 0.0
    %535 = vmatpush1.msra.mxu0 %v498
    %536 = vmatprep.subr.mxu0 0.0
    %537 = vmatpush1.msra.mxu0 %v499
    %538 = vmatprep.subr.mxu0 0.0
    %539 = vmatpush1.msra.mxu0 %v500
    %540 = vmatprep.subr.mxu0 0.0
    %541 = vmatpush1.msra.mxu0 0.0
    %542 = vmatprep.subr.mxu0 0.0
    %543 = vmatpush1.msra.mxu0 0.0
    %544 = vmatprep.subr.mxu0 0.0
    %545 = vmatpush1.msra.mxu0 0.0
    %546 = vmatprep.subr.mxu0 0.0
    %547 = vmatpush1.msra.mxu0 0.0
    %548 = vmatprep.subr.mxu0 0.0
    %549 = vmatpush1.msra.mxu0 0.0
    %550 = vmatprep.subr.mxu0 0.0
    %551 = vmatpush1.msra.mxu0 0.0
    %552 = vmatprep.subr.mxu0 0.0
    %553 = vmatpush1.msra.mxu0 0.0
    %554 = vmatprep.subr.mxu0 0.0
    %555 = vmatpush1.msra.mxu0 0.0
    %556 = vmatprep.subr.mxu0 0.0
    %557 = vmatpush1.msra.mxu0 0.0
    %558 = vmatprep.subr.mxu0 0.0
    %559 = vmatpush1.msra.mxu0 0.0
    %560 = vmatprep.subr.mxu0 0.0
    %561 = vmatpush1.msra.mxu0 0.0
    %562 = vmatprep.subr.mxu0 0.0
    %563 = vmatpush1.msra.mxu0 0.0
    %564 = vmatprep.subr.mxu0 0.0
    %565 = vmatpush1.msra.mxu0 0.0
    %566 = vmatprep.subr.mxu0 0.0
    %567 = vmatpush1.msra.mxu0 0.0
    %568 = vmatprep.subr.mxu0 0.0
    %569 = vmatpush1.msra.mxu0 0.0
    %570 = vmatprep.subr.mxu0 0.0
    %571 = vmatpush1.msra.mxu0 0.0
    %572 = vmatprep.mubr.f32.mxu0 0.0
    %573 = vmatmul.mubr.f32.gmra.mrb[0].mxu0 %v484
    %v574 = vpop.f32.mrb[0].mxu0
    %v575 = vadd.f32 %v506, %v574
    %v576 = vpop.f32.mrb[0].mxu0
    %577 = vdwg.mxu0
    %v578 = vmax.f32 %v575, 0.0
    %v579 = vadd.f32 %v578, %v390
    %580 = vst [vmem:[%s11] sm:$0xff] %v579
    // Predicated region
    $region66: #{_mlp_forward_impl.1} parent=1 // pred_check
      _
    $region67: #{_mlp_forward_impl.1} parent=1 // pred_check_branch
      %582 = sbr.rel (0) target = $region69
    $region68: #{_mlp_forward_impl.1} parent=1 // pred_region
      _
    $region69: #{_mlp_forward_impl.1} parent=1 // pred_fallthru
      _
    // Predicated region
    $region70: #{_mlp_forward_impl.1} parent=1 // pred_check
      _
    $region71: #{_mlp_forward_impl.1} parent=1 // pred_check_branch
      %584 = sbr.rel (0) target = $region73
    $region72: #{_mlp_forward_impl.1} parent=1 // pred_region
      _
    $region73: #{_mlp_forward_impl.1} parent=1 // pred_fallthru
      _
    %585 = vsyncpa [#allocation3], 1
    %586 = vsyncpa [#allocation5], 1
    %587 = vsyncpa [#allocation8], 1

</llo_original>
